<compile_context>
chip_gen: v7x
topology: tpu7x:2x2x1
jax: 0.10.0
libtpu: 0.0.40
codegen_flags: <defaults>
</compile_context>

<pallas_src>
import jax
import jax.numpy as jnp
from jax import lax
from jax.experimental import pallas as pl
from jax.experimental.pallas import tpu as pltpu


def _round_up(x, m):
    return (x + m - 1) // m * m


def _cdiv(a, b):
    return (a + b - 1) // b


def _choose_tiling(S, C, itemsize, s_tile_max=None, vmem_budget_bytes=8 << 20):
    """Pick (s_tile, chunk, n_tiles): s_tile = lanes per grid step (multiple of
    128, prefers exact division of the 128-rounded S to avoid an HBM padding
    copy), chunk = lanes per in-kernel loop iteration (divides s_tile)."""
    S128 = _round_up(S, 128)

    # lanes resident per grid step: x (double-buffered) + int32 labels (dbl-buf)
    per_lane = 2 * (C * itemsize + 4)
    max_lanes = max(128, (vmem_budget_bytes // per_lane) // 128 * 128)
    if s_tile_max is not None:
        max_lanes = max(128, min(max_lanes, _round_up(s_tile_max, 128)))

    if S128 <= max_lanes:
        s_tile = S128                                    # single spatial tile
    else:
        # Prefer a tile size that divides S128 exactly (no HBM padding copy);
        # search multiples of 128 from max_lanes down to max_lanes/4.
        k_hi = max_lanes // 128
        k_lo = max(1, k_hi // 4)
        s_tile = 0
        for k in range(k_hi, k_lo - 1, -1):
            if S128 % (k * 128) == 0:
                s_tile = k * 128
                break
        if s_tile == 0:
            # fall back to balanced tiles (requires padding x in HBM)
            n_tiles = _cdiv(S128, max_lanes)
            s_tile = _round_up(_cdiv(S128, n_tiles), 128)

    # lane-chunk per inner-loop iteration: keep a (C, chunk) f32 slab ~8 vregs
    # so the elementwise softmax chain does not spill.  chunk must divide s_tile.
    chunk_target = max(1, min(2048, 8192 // max(C, 1)) // 128)   # units of 128
    chunk = 128
    for c in range(chunk_target, 0, -1):
        if (s_tile // 128) % c == 0:
            chunk = c * 128
            break

    n_tiles = _cdiv(S128, s_tile)
    return s_tile, chunk, n_tiles


def _make_kernel(*, C, S, s_tile, chunk, smooth, alpha, beta, square, needs_mask):
    n_chunks = s_tile // chunk
    unroll_static = n_chunks <= 4

    def kernel(x_ref, lab_ref, o_ref, tp_acc, a_acc, b_acc):
        si = pl.program_id(1)

        @pl.when(si == 0)
        def _init():
            tp_acc[...] = jnp.zeros_like(tp_acc)
            a_acc[...] = jnp.zeros_like(a_acc)
            b_acc[...] = jnp.zeros_like(b_acc)

        # Hoisted constants (iotas are not CSE'd by JAX — build them once).
        ch_iota = lax.broadcasted_iota(jnp.int32, (C, chunk), 0)
        lane_iota = lax.broadcasted_iota(jnp.int32, (1, chunk), 1)
        tile_base = si * s_tile

        def chunk_body(j, carry):
            tp_p, a_p, b_p = carry
            start = j * chunk
            if not isinstance(start, int):
                start = pl.multiple_of(start, chunk)
            x = x_ref[0, :, pl.ds(start, chunk)].astype(jnp.float32)   # (C, chunk)
            lab = lab_ref[0, :, pl.ds(start, chunk)]                   # (1, chunk)

            # --- softmax over channels (sublane axis) ----------------------
            m = jnp.max(x, axis=0, keepdims=True)          # (1, chunk)
            e = jnp.exp(x - m)                             # EUP
            d = jnp.sum(e, axis=0, keepdims=True)
            r = pl.reciprocal(d, approx=True)              # EUP vrcp (free slot)
            r = r * (2.0 - d * r)                          # Newton step -> ~f32
            sm = e * r                                     # (C, chunk)

            # --- one-hot from integer labels (no dense y traffic) ----------
            onehot = lab == ch_iota                        # (C, chunk) bool

            if square:
                sm2 = sm * sm
                tp_t = jnp.where(onehot, sm2, 0.0)         # (sm*y)^2
                a_t = sm2                                  # fp^2 = sum(sm^2) - tp
                one_m = 1.0 - sm
                b_t = jnp.where(onehot, one_m * one_m, 0.0)  # ((1-sm)*y)^2
            else:
                tp_t = jnp.where(onehot, sm, 0.0)          # sm*y
                a_t = sm                                   # fp = sum(sm) - tp
                b_t = onehot.astype(jnp.float32)           # fn = count(y) - tp

            if needs_mask:
                # Padded spatial lanes carry x==0 / label==-1, so onehot-based
                # terms are already zero there; only a_t (sum of softmax) picks
                # up spurious 1/C contributions and needs masking.
                valid = (tile_base + start + lane_iota) < S
                a_t = jnp.where(valid, a_t, 0.0)

            tp_p = tp_p + jnp.sum(tp_t, axis=1, keepdims=True)   # (C, 1)
            a_p = a_p + jnp.sum(a_t, axis=1, keepdims=True)
            b_p = b_p + jnp.sum(b_t, axis=1, keepdims=True)
            return tp_p, a_p, b_p

        zero = jnp.zeros((C, 1), jnp.float32)
        carry = (zero, zero, zero)
        if unroll_static:
            for j in range(n_chunks):
                carry = chunk_body(j, carry)
        else:
            carry = lax.fori_loop(0, n_chunks, chunk_body, carry)
        tp_p, a_p, b_p = carry

        tp_acc[...] += tp_p
        a_acc[...] += a_p
        b_acc[...] += b_p

        @pl.when(si == pl.num_programs(1) - 1)
        def _finalize():
            tp_s = tp_acc[...]
            fp_s = a_acc[...] - tp_s
            fn_s = b_acc[...] if square else b_acc[...] - tp_s
            tv = (tp_s + smooth) / (tp_s + alpha * fp_s + beta * fn_s + smooth)
            o_ref[...] = tv.reshape(1, C, 1)

    return kernel


def tversky_loss(x, y, loss_mask=None, smooth=1e-6, alpha=0.7, beta=0.3,
                 square=False, s_tile_max=None, vmem_budget_bytes=8 << 20):
    """x: (B, C, *spatial) logits (any float dtype).  y: integer label map of
    shape (B, *spatial) or (B, 1, *spatial), or a hard one-hot (B, C, *spatial).
    Returns the scalar Tversky loss (1 - mean tversky index)."""
    # TODO(synk): optional loss_mask path is not implemented in the kernel.
    assert loss_mask is None, "loss_mask is not supported by the Pallas kernel"

    B, C = x.shape[0], x.shape[1]
    S = 1
    for d in x.shape[2:]:
        S *= int(d)

    # --- gt -> integer label map (B, 1, S) --------------------------------
    if y.ndim == x.ndim - 1:
        lab = y
    elif y.ndim == x.ndim and y.shape[1] == 1:
        lab = y[:, 0]
    elif y.ndim == x.ndim and y.shape[1] == C:
        # TODO(synk): dense *soft* gt unsupported; hard one-hot -> label map.
        lab = jnp.argmax(y, axis=1)
    else:
        raise ValueError(f"unsupported gt shape {y.shape} for logits {x.shape}")
    lab = lab.reshape(B, 1, S).astype(jnp.int32)

    # keep original logits dtype in HBM (bf16 stays bf16); cast per chunk in-kernel
    x3 = x.reshape(B, C, S)
    itemsize = x3.dtype.itemsize

    # --- tiling ------------------------------------------------------------
    s_tile, chunk, n_tiles = _choose_tiling(S, C, itemsize, s_tile_max,
                                            vmem_budget_bytes)
    S_pad = n_tiles * s_tile
    needs_mask = S_pad != S
    if needs_mask:
        # Only when S is not exactly tileable; costs one extra HBM copy of x,
        # so the tiling above prefers exact divisors.
        x3 = jnp.pad(x3, ((0, 0), (0, 0), (0, S_pad - S)))
        lab = jnp.pad(lab, ((0, 0), (0, 0), (0, S_pad - S)), constant_values=-1)

    kernel = _make_kernel(C=C, S=S, s_tile=s_tile, chunk=chunk, smooth=smooth,
                          alpha=alpha, beta=beta, square=square,
                          needs_mask=needs_mask)

    cost = pl.CostEstimate(
        flops=12 * B * C * S_pad,
        transcendentals=B * C * S_pad,
        bytes_accessed=B * C * S_pad * itemsize + B * S_pad * 4 + B * C * 4,
    )

    tv = pl.pallas_call(
        kernel,
        out_shape=jax.ShapeDtypeStruct((B, C, 1), jnp.float32),
        grid=(B, n_tiles),
        in_specs=[
            pl.BlockSpec((1, C, s_tile), lambda b, s: (b, 0, s)),
            pl.BlockSpec((1, 1, s_tile), lambda b, s: (b, 0, s)),
        ],
        out_specs=pl.BlockSpec((1, C, 1), lambda b, s: (b, 0, 0)),
        scratch_shapes=[
            pltpu.VMEM((C, 1), jnp.float32),   # tp partial sums
            pltpu.VMEM((C, 1), jnp.float32),   # sum(sm) / sum(sm^2) partials
            pltpu.VMEM((C, 1), jnp.float32),   # count / fn^2 partials
        ],
        compiler_params=pltpu.CompilerParams(
            dimension_semantics=("parallel", "arbitrary"),
        ),
        cost_estimate=cost,
    )(x3, lab)

    # tiny final reduction in the wrapper: kernel output stays per-(b, c).
    return 1.0 - jnp.mean(tv[:, :, 0])


def _reference(x, y_labels, smooth=1e-6, alpha=0.7, beta=0.3, square=False):
    # pure-JAX port of the PyTorch forward (label-map gt path)
    C = x.shape[1]
    sm = jax.nn.softmax(x.astype(jnp.float32), axis=1)
    y1h = jax.nn.one_hot(y_labels.astype(jnp.int32), C, axis=1, dtype=jnp.float32)
    tp = sm * y1h
    fp = sm * (1.0 - y1h)
    fn = (1.0 - sm) * y1h
    if square:
        tp, fp, fn = tp ** 2, fp ** 2, fn ** 2
    axes = tuple(range(2, x.ndim))
    tp = tp.sum(axes)
    fp = fp.sum(axes)
    fn = fn.sum(axes)
    tv = (tp + smooth) / (tp + alpha * fp + beta * fn + smooth)
    return 1.0 - tv.mean()


if __name__ == "__main__":
    key = jax.random.PRNGKey(0)
    k1, k2, k3, k4 = jax.random.split(key, 4)

    # case 1: multi-tile spatial accumulation (s_tile_max forces 2 S-tiles)
    B, C, H, W = 2, 4, 16, 16
    x = jax.random.normal(k1, (B, C, H, W), dtype=jnp.float32)
    y = jax.random.randint(k2, (B, H, W), 0, C, dtype=jnp.int32)
    out = tversky_loss(x, y, s_tile_max=128)
    jax.block_until_ready(out)
    ref = _reference(x, y)
    assert jnp.allclose(out, ref, atol=1e-5, rtol=1e-5), (out, ref)

    # case 2: square=True path
    out_sq = tversky_loss(x, y, square=True, s_tile_max=128)
    jax.block_until_ready(out_sq)
    ref_sq = _reference(x, y, square=True)
    assert jnp.allclose(out_sq, ref_sq, atol=1e-5, rtol=1e-5), (out_sq, ref_sq)

    # case 3: non-128-multiple spatial size (padding + in-kernel mask),
    #         gt given as (B, 1, H, W)
    B2, C2, H2, W2 = 2, 5, 10, 10
    x2 = jax.random.normal(k3, (B2, C2, H2, W2), dtype=jnp.float32)
    y2 = jax.random.randint(k4, (B2, 1, H2, W2), 0, C2, dtype=jnp.int32)
    out2 = tversky_loss(x2, y2)
    jax.block_until_ready(out2)
    ref2 = _reference(x2, y2[:, 0])
    assert jnp.allclose(out2, ref2, atol=1e-5, rtol=1e-5), (out2, ref2)

    # case 4: bf16 logits stay bf16 in HBM, cast to f32 per chunk in-kernel
    x_bf = x.astype(jnp.bfloat16)
    out_bf = tversky_loss(x_bf, y)
    jax.block_until_ready(out_bf)
    ref_bf = _reference(x_bf, y)
    assert jnp.allclose(out_bf, ref_bf, atol=1e-4, rtol=1e-4), (out_bf, ref_bf)

    print("KERNEL_OK")
</pallas_src>

<mosaic_0001>
module attributes {stable_mosaic.version = 11 : i64} {
  func.func @kernel(%arg0: i32, %arg1: i32, %arg2: memref<1x4x128xf32, #tpu.memory_space<vmem>>, %arg3: memref<1x1x128xi32, #tpu.memory_space<vmem>>, %arg4: memref<1x4x1xf32, #tpu.memory_space<vmem>>, %arg5: memref<4x1xf32, #tpu.memory_space<vmem>>, %arg6: memref<4x1xf32, #tpu.memory_space<vmem>>, %arg7: memref<4x1xf32, #tpu.memory_space<vmem>>) attributes {dimension_semantics = [#tpu.dimension_semantics<parallel>, #tpu.dimension_semantics<arbitrary>], iteration_bounds = array<i64: 2, 2>, scalar_prefetch = 0 : i64, scratch_operands = 3 : i64, tpu.core_type = #tpu.core_type<tc>, window_params = [{transform_indices = @transform_0, window_bounds = array<i64: 1, 4, 128>}, {transform_indices = @transform_1, window_bounds = array<i64: 1, 1, 128>}, {transform_indices = @transform_2, window_bounds = array<i64: 1, 4, 1>}]} {
    %c0_i32 = arith.constant 0 : i32
    %0 = arith.cmpi eq, %arg1, %c0_i32 : i32
    %1 = arith.extui %0 : i1 to i32
    %c0_i32_0 = arith.constant 0 : i32
    %2 = arith.cmpi ne, %1, %c0_i32_0 : i32
    scf.if %2 {
      %cst_26 = arith.constant 0.000000e+00 : f32
      %50 = vector.broadcast %cst_26 : f32 to vector<4x1xf32>
      %c0_27 = arith.constant 0 : index
      %c0_28 = arith.constant 0 : index
      %51 = vector.load %arg5[%c0_27, %c0_28] : memref<4x1xf32, #tpu.memory_space<vmem>>, vector<4x1xf32>
      tpu.vector_store %arg5[%c0_27, %c0_28], %50 {strides = array<i32>} : memref<4x1xf32, #tpu.memory_space<vmem>>, vector<4x1xf32>,
      %cst_29 = arith.constant 0.000000e+00 : f32
      %52 = vector.broadcast %cst_29 : f32 to vector<4x1xf32>
      %c0_30 = arith.constant 0 : index
      %c0_31 = arith.constant 0 : index
      %53 = vector.load %arg6[%c0_30, %c0_31] : memref<4x1xf32, #tpu.memory_space<vmem>>, vector<4x1xf32>
      tpu.vector_store %arg6[%c0_30, %c0_31], %52 {strides = array<i32>} : memref<4x1xf32, #tpu.memory_space<vmem>>, vector<4x1xf32>,
      %cst_32 = arith.constant 0.000000e+00 : f32
      %54 = vector.broadcast %cst_32 : f32 to vector<4x1xf32>
      %c0_33 = arith.constant 0 : index
      %c0_34 = arith.constant 0 : index
      %55 = vector.load %arg7[%c0_33, %c0_34] : memref<4x1xf32, #tpu.memory_space<vmem>>, vector<4x1xf32>
      tpu.vector_store %arg7[%c0_33, %c0_34], %54 {strides = array<i32>} : memref<4x1xf32, #tpu.memory_space<vmem>>, vector<4x1xf32>,
    } else {
    }
    %3 = tpu.iota {dimensions = array<i32: 0>} : vector<4x128xi32>
    %cst = arith.constant 0.000000e+00 : f32
    %4 = vector.broadcast %cst : f32 to vector<4x1xf32>
    %c0 = arith.constant 0 : index
    %c0_1 = arith.constant 0 : index
    %c0_2 = arith.constant 0 : index
    %5 = vector.load %arg2[%c0, %c0_1, %c0_2] : memref<1x4x128xf32, #tpu.memory_space<vmem>>, vector<1x4x128xf32>
    %6 = vector.shape_cast %5 : vector<1x4x128xf32> to vector<4x128xf32>
    %c0_3 = arith.constant 0 : index
    %c0_4 = arith.constant 0 : index
    %c0_5 = arith.constant 0 : index
    %7 = vector.load %arg3[%c0_3, %c0_4, %c0_5] : memref<1x1x128xi32, #tpu.memory_space<vmem>>, vector<1x1x128xi32>
    %8 = vector.shape_cast %7 : vector<1x1x128xi32> to vector<1x128xi32>
    %cst_6 = arith.constant dense<0xFF800000> : vector<128xf32>
    %9 = vector.multi_reduction <maximumf>, %6, %cst_6 [0] : vector<4x128xf32> to vector<128xf32>
    %10 = vector.shape_cast %9 : vector<128xf32> to vector<1x128xf32>
    %11 = vector.broadcast %10 : vector<1x128xf32> to vector<4x128xf32>
    %12 = arith.subf %6, %11 : vector<4x128xf32>
    %13 = math.exp %12 : vector<4x128xf32>
    %cst_7 = arith.constant dense<0.000000e+00> : vector<128xf32>
    %14 = vector.multi_reduction <add>, %13, %cst_7 [0] : vector<4x128xf32> to vector<128xf32>
    %15 = vector.shape_cast %14 : vector<128xf32> to vector<1x128xf32>
    %16 = tpu.reciprocal %15 {approx = true} : vector<1x128xf32> -> vector<1x128xf32>
    %17 = arith.mulf %15, %16 : vector<1x128xf32>
    %cst_8 = arith.constant 2.000000e+00 : f32
    %18 = vector.broadcast %cst_8 : f32 to vector<1x128xf32>
    %19 = arith.subf %18, %17 : vector<1x128xf32>
    %20 = arith.mulf %16, %19 : vector<1x128xf32>
    %21 = vector.broadcast %20 : vector<1x128xf32> to vector<4x128xf32>
    %22 = arith.mulf %13, %21 : vector<4x128xf32>
    %23 = vector.broadcast %8 : vector<1x128xi32> to vector<4x128xi32>
    %24 = arith.cmpi eq, %23, %3 : vector<4x128xi32>
    %cst_9 = arith.constant 0.000000e+00 : f32
    %25 = vector.broadcast %cst_9 : f32 to vector<4x128xf32>
    %26 = arith.select %24, %22, %25 : vector<4x128xi1>, vector<4x128xf32>
    %27 = arith.extui %24 : vector<4x128xi1> to vector<4x128xi32>
    %28 = arith.sitofp %27 : vector<4x128xi32> to vector<4x128xf32>
    %cst_10 = arith.constant dense<0.000000e+00> : vector<4xf32>
    %29 = vector.multi_reduction <add>, %26, %cst_10 [1] : vector<4x128xf32> to vector<4xf32>
    %30 = vector.shape_cast %29 : vector<4xf32> to vector<4x1xf32>
    %31 = arith.addf %4, %30 : vector<4x1xf32>
    %cst_11 = arith.constant dense<0.000000e+00> : vector<4xf32>
    %32 = vector.multi_reduction <add>, %22, %cst_11 [1] : vector<4x128xf32> to vector<4xf32>
    %33 = vector.shape_cast %32 : vector<4xf32> to vector<4x1xf32>
    %34 = arith.addf %4, %33 : vector<4x1xf32>
    %cst_12 = arith.constant dense<0.000000e+00> : vector<4xf32>
    %35 = vector.multi_reduction <add>, %28, %cst_12 [1] : vector<4x128xf32> to vector<4xf32>
    %36 = vector.shape_cast %35 : vector<4xf32> to vector<4x1xf32>
    %37 = arith.addf %4, %36 : vector<4x1xf32>
    %c0_13 = arith.constant 0 : index
    %c0_14 = arith.constant 0 : index
    %38 = vector.load %arg5[%c0_13, %c0_14] : memref<4x1xf32, #tpu.memory_space<vmem>>, vector<4x1xf32>
    %39 = arith.addf %38, %31 : vector<4x1xf32>
    %c0_15 = arith.constant 0 : index
    %c0_16 = arith.constant 0 : index
    %40 = vector.load %arg5[%c0_15, %c0_16] : memref<4x1xf32, #tpu.memory_space<vmem>>, vector<4x1xf32>
    tpu.vector_store %arg5[%c0_15, %c0_16], %39 {strides = array<i32>} : memref<4x1xf32, #tpu.memory_space<vmem>>, vector<4x1xf32>,
    %c0_17 = arith.constant 0 : index
    %c0_18 = arith.constant 0 : index
    %41 = vector.load %arg6[%c0_17, %c0_18] : memref<4x1xf32, #tpu.memory_space<vmem>>, vector<4x1xf32>
    %42 = arith.addf %41, %34 : vector<4x1xf32>
    %c0_19 = arith.constant 0 : index
    %c0_20 = arith.constant 0 : index
    %43 = vector.load %arg6[%c0_19, %c0_20] : memref<4x1xf32, #tpu.memory_space<vmem>>, vector<4x1xf32>
    tpu.vector_store %arg6[%c0_19, %c0_20], %42 {strides = array<i32>} : memref<4x1xf32, #tpu.memory_space<vmem>>, vector<4x1xf32>,
    %c0_21 = arith.constant 0 : index
    %c0_22 = arith.constant 0 : index
    %44 = vector.load %arg7[%c0_21, %c0_22] : memref<4x1xf32, #tpu.memory_space<vmem>>, vector<4x1xf32>
    %45 = arith.addf %44, %37 : vector<4x1xf32>
    %c0_23 = arith.constant 0 : index
    %c0_24 = arith.constant 0 : index
    %46 = vector.load %arg7[%c0_23, %c0_24] : memref<4x1xf32, #tpu.memory_space<vmem>>, vector<4x1xf32>
    tpu.vector_store %arg7[%c0_23, %c0_24], %45 {strides = array<i32>} : memref<4x1xf32, #tpu.memory_space<vmem>>, vector<4x1xf32>,
    %c1_i32 = arith.constant 1 : i32
    %47 = arith.cmpi eq, %arg1, %c1_i32 : i32
    %48 = arith.extui %47 : i1 to i32
    %c0_i32_25 = arith.constant 0 : i32
    %49 = arith.cmpi ne, %48, %c0_i32_25 : i32
    scf.if %49 {
      %c0_26 = arith.constant 0 : index
      %c0_27 = arith.constant 0 : index
      %50 = vector.load %arg5[%c0_26, %c0_27] : memref<4x1xf32, #tpu.memory_space<vmem>>, vector<4x1xf32>
      %c0_28 = arith.constant 0 : index
      %c0_29 = arith.constant 0 : index
      %51 = vector.load %arg6[%c0_28, %c0_29] : memref<4x1xf32, #tpu.memory_space<vmem>>, vector<4x1xf32>
      %52 = arith.subf %51, %50 : vector<4x1xf32>
      %c0_30 = arith.constant 0 : index
      %c0_31 = arith.constant 0 : index
      %53 = vector.load %arg7[%c0_30, %c0_31] : memref<4x1xf32, #tpu.memory_space<vmem>>, vector<4x1xf32>
      %54 = arith.subf %53, %50 : vector<4x1xf32>
      %cst_32 = arith.constant 9.99999997E-7 : f32
      %55 = vector.broadcast %cst_32 : f32 to vector<4x1xf32>
      %56 = arith.addf %50, %55 : vector<4x1xf32>
      %cst_33 = arith.constant 0.699999988 : f32
      %57 = vector.broadcast %cst_33 : f32 to vector<4x1xf32>
      %58 = arith.mulf %57, %52 : vector<4x1xf32>
      %59 = arith.addf %50, %58 : vector<4x1xf32>
      %cst_34 = arith.constant 3.000000e-01 : f32
      %60 = vector.broadcast %cst_34 : f32 to vector<4x1xf32>
      %61 = arith.mulf %60, %54 : vector<4x1xf32>
      %62 = arith.addf %59, %61 : vector<4x1xf32>
      %cst_35 = arith.constant 9.99999997E-7 : f32
      %63 = vector.broadcast %cst_35 : f32 to vector<4x1xf32>
      %64 = arith.addf %62, %63 : vector<4x1xf32>
      %65 = arith.divf %56, %64 : vector<4x1xf32>
      %66 = vector.shape_cast %65 : vector<4x1xf32> to vector<1x4x1xf32>
      %c0_36 = arith.constant 0 : index
      %c0_37 = arith.constant 0 : index
      %c0_38 = arith.constant 0 : index
      %67 = vector.load %arg4[%c0_36, %c0_37, %c0_38] : memref<1x4x1xf32, #tpu.memory_space<vmem>>, vector<1x4x1xf32>
      tpu.vector_store %arg4[%c0_36, %c0_37, %c0_38], %66 {strides = array<i32>} : memref<1x4x1xf32, #tpu.memory_space<vmem>>, vector<1x4x1xf32>,
    } else {
    }
    return
  }
  func.func @transform_0(%arg0: i32, %arg1: i32) -> (i32, i32, i32) {
    %c0_i32 = arith.constant 0 : i32
    %c0_i32_0 = arith.constant 0 : i32
    return %arg0, %c0_i32, %arg1 : i32, i32, i32
  }
  func.func @transform_1(%arg0: i32, %arg1: i32) -> (i32, i32, i32) {
    %c0_i32 = arith.constant 0 : i32
    %c0_i32_0 = arith.constant 0 : i32
    return %arg0, %c0_i32, %arg1 : i32, i32, i32
  }
  func.func @transform_2(%arg0: i32, %arg1: i32) -> (i32, i32, i32) {
    %c0_i32 = arith.constant 0 : i32
    %c0_i32_0 = arith.constant 0 : i32
    %c0_i32_1 = arith.constant 0 : i32
    return %arg0, %c0_i32, %c0_i32_0 : i32, i32, i32
  }
}

</mosaic_0001>

<llo_original>
// kernel: tpu_custom_call.1
$region0: #{tpu_custom_call.1}
  #allocation0 [shape = 'u32[]', space=smem, size = 0x4, offset = 0x4, fixed_abs, tag = 'smem constant byte address 0x4 - core index']
  #allocation1 [shape = 'u32[144,128]{1,0:T(1,128)}', space=vmem, size = 0x12000, scoped, tag = 'internal scratch']
  #allocation2 [shape = 'f32[4,1]{1,0:T(4,128)}', space=vmem, size = 0x800, scoped, tag = 'scratch operand']
  #allocation3 [shape = 'f32[4,1]{1,0:T(4,128)}', space=vmem, size = 0x800, scoped, tag = 'scratch operand']
  #allocation4 [shape = 'f32[4,1]{1,0:T(4,128)}', space=vmem, size = 0x800, scoped, tag = 'scratch operand']
  %s0 = inlined_call_operand.hbm [shape: f32[2,4,256], index: 0, kind: input, shape index: {}]
  %s1 = inlined_call_operand.hbm [shape: s32[2,1,256], index: 1, kind: input, shape index: {}]
  %s2 = inlined_call_operand.vmem [shape: f32[2,4,1], index: 2, kind: output, shape index: {}]
  %s3 = sld [smem:[#allocation0]]
  $region57: #{tpu_custom_call.1} parent=0
    _
  %s5 = ssub.s32 1, %s3
  %s6 = scalar_select 0, %s5, %s3
  $region1: #{tpu_custom_call.1} parent=0
    #allocation5 [shape = 'u8[4096]{0}', space=vmem, size = 0x1000, scoped, tag = 'input window, operand 0']
    #allocation6 [shape = 's32[2]{0}', space=sflag, size = 0x8, scoped, tag = 'scoped memory for tpu_custom_call.1']
    #allocation7 [shape = 'u8[1024]{0}', space=vmem, size = 0x400, scoped, tag = 'input window, operand 1']
    #allocation8 [shape = 's32[2]{0}', space=sflag, size = 0x8, scoped, tag = 'scoped memory for tpu_custom_call.1']
    %7 = vsyncpa [#allocation6], 0
    %s8 = scalar_lea.sflag [#allocation6], 1
    %9 = vsyncpa %s8, 0
    %10 = vsyncpa [#allocation8], 0
    %s11 = scalar_lea.sflag [#allocation8], 1
    %12 = vsyncpa %s11, 0
    loop: start=0, step=1, limit=6
    $region2: #{tpu_custom_call.1} parent=1 // loop_pre_header
      _
    $region3: #{tpu_custom_call.1} parent=1 // loop_header
      %s14 = sphi 0, %s18
      %p15 = scmp.ge.s32.totalorder %s14, 6
      %s21 = sphi 0, %s33
      %s22 = sphi 0, %s29
      %s23 = sphi 0, %s21
      %s24 = sphi 0, %s22
      %s25 = sphi 0, %s23
      %s26 = sphi 0, %s24
      %s38 = sphi 0, %s40
      %s41 = sphi 0, %s38
      %s42 = sphi 0, %s41
      %s58 = sphi 0, %s42
      %s66 = sphi 0, %s68
      %s69 = sphi 0, %s66
      %s70 = sphi 0, %s69
      %s86 = sphi 0, %s70
      %s92 = sphi 0, %s94
      %s95 = sphi 0, %s92
      %s96 = sphi 0, %s95
      %s112 = sphi 0, %s96
    $region4: #{tpu_custom_call.1} parent=1 // loop_header_branch
      %17 = sbr.rel (%p15) target = $region8
    $region5: #{tpu_custom_call.1} parent=1 // loop_body
      %s19 = ssub.s32 %s14, 1
      %s20 = ssub.s32 %s14, 2
      %s27 = sadd.s32 1, %s22
      %p28 = scmp.ge.s32.totalorder %s27, 2
      %s29 = scalar_select %p28, 0, %s27
      %s30 = sadd.s32 1, %s21
      %s31 = scalar_select %p28, %s30, %s21
      %p32 = scmp.ge.s32.totalorder %s31, 2
      %s33 = scalar_select %p32, 0, %s31
      %s34 = ssub.s32 %s21, %s33
      %s35 = ssub.s32 %s22, %s29
      %s36 = sor.u32 %s34, %s35
      %p37 = scmp.eq.s32.totalorder %s36, 0
      %s39 = sadd.s32 %s38, 1
      %s40 = scalar_select %p37, %s38, %s39
      %p43 = pneg %p37
      %p44 = scmp.eq.s32.totalorder %s14, 3
      %p45 = por %p43, %p44
      %p46 = scmp.ne.s32.totalorder %s38, %s41
      %p47 = scmp.eq.s32.totalorder %s14, 0
      %p48 = por %p46, %p47
      %p49 = scmp.ne.s32.totalorder %s38, %s41
      %p50 = scmp.eq.s32.totalorder %s19, 3
      %p51 = por %p49, %p50
      %p52 = scmp.ne.s32.totalorder %s41, %s42
      %p53 = scmp.eq.s32.totalorder %s19, 0
      %p54 = por %p52, %p53
      %p55 = scmp.ne.s32.totalorder %s41, %s42
      %p56 = scmp.eq.s32.totalorder %s20, 3
      %p57 = por %p55, %p56
      %p59 = scmp.ne.s32.totalorder %s42, %s58
      %p60 = scmp.eq.s32.totalorder %s20, 0
      %p61 = por %p59, %p60
      %s62 = ssub.s32 %s21, %s33
      %s63 = ssub.s32 %s22, %s29
      %s64 = sor.u32 %s62, %s63
      %p65 = scmp.eq.s32.totalorder %s64, 0
      %s67 = sadd.s32 %s66, 1
      %s68 = scalar_select %p65, %s66, %s67
      %p71 = pneg %p65
      %p72 = scmp.eq.s32.totalorder %s14, 3
      %p73 = por %p71, %p72
      %p74 = scmp.ne.s32.totalorder %s66, %s69
      %p75 = scmp.eq.s32.totalorder %s14, 0
      %p76 = por %p74, %p75
      %p77 = scmp.ne.s32.totalorder %s66, %s69
      %p78 = scmp.eq.s32.totalorder %s19, 3
      %p79 = por %p77, %p78
      %p80 = scmp.ne.s32.totalorder %s69, %s70
      %p81 = scmp.eq.s32.totalorder %s19, 0
      %p82 = por %p80, %p81
      %p83 = scmp.ne.s32.totalorder %s69, %s70
      %p84 = scmp.eq.s32.totalorder %s20, 3
      %p85 = por %p83, %p84
      %p87 = scmp.ne.s32.totalorder %s70, %s86
      %p88 = scmp.eq.s32.totalorder %s20, 0
      %p89 = por %p87, %p88
      %s90 = ssub.s32 %s21, %s33
      %p91 = scmp.eq.s32.totalorder %s90, 0
      %s93 = sadd.s32 %s92, 1
      %s94 = scalar_select %p91, %s92, %s93
      %p97 = pneg %p91
      %p98 = scmp.eq.s32.totalorder %s14, 3
      %p99 = por %p97, %p98
      %p100 = scmp.ne.s32.totalorder %s92, %s95
      %p101 = scmp.eq.s32.totalorder %s14, 0
      %p102 = por %p100, %p101
      %p103 = scmp.ne.s32.totalorder %s92, %s95
      %p104 = scmp.eq.s32.totalorder %s19, 3
      %p105 = por %p103, %p104
      %p106 = scmp.ne.s32.totalorder %s95, %s96
      %p107 = scmp.eq.s32.totalorder %s19, 0
      %p108 = por %p106, %p107
      %p109 = scmp.ne.s32.totalorder %s95, %s96
      %p110 = scmp.eq.s32.totalorder %s20, 3
      %p111 = por %p109, %p110
      %p113 = scmp.ne.s32.totalorder %s96, %s112
      %p114 = scmp.eq.s32.totalorder %s20, 0
      %p115 = por %p113, %p114
      %p116 = scmp.le.s32.totalorder 1, %s14
      %p117 = scmp.lt.s32.totalorder %s14, 5
      %p118 = pnand %p116, %p117
      %p119 = pneg %p118
      // Predicated region
      $region9: #{tpu_custom_call.1} parent=5 // pred_check
        _
      $region10: #{tpu_custom_call.1} parent=5 // pred_check_branch
        %121 = sbr.rel (%p118) target = $region12
      $region11: #{tpu_custom_call.1} parent=5 // pred_region
        %s122 = ssub.s32 %s14, 1
      $region12: #{tpu_custom_call.1} parent=5 // pred_fallthru
        _
      %p123 = scmp.lt.s32.totalorder %s14, 4
      // Predicated region
      $region13: #{tpu_custom_call.1} parent=5 // pred_check
        %p124 = pneg %p123
      $region14: #{tpu_custom_call.1} parent=5 // pred_check_branch
        %126 = sbr.rel (%p124) target = $region16
      $region15: #{tpu_custom_call.1} parent=5 // pred_region
        // Predicated region
        $region17: #{tpu_custom_call.1} parent=15 // pred_check
          %p127 = pneg %p48
        $region18: #{tpu_custom_call.1} parent=15 // pred_check_branch
          %129 = sbr.rel (%p127) target = $region20
        $region19: #{tpu_custom_call.1} parent=15 // pred_region
          %s130 = sand.u32 %s38, 1
          %s131 = scalar_lea.sflag [#allocation6], %s130
          %s132 = sand.u32 %s38, 1
          %s133 = smul.addr %s132, 4
          %s134 = scalar_lea.vmem [#allocation5], %s133
          %s136 = ssub.s32 64, 64
          %137 = vsyncadd %s131, %s136
          %s138 = smul.addr %s21, 2
          %s139 = sadd.s32 %s22, %s138
          %s140 = smul.addr %s139, 64
          %s141 = scalar_lea.hbm %s0, %s140
          %s143 = sshll.u32 %s134, 4
          %s144 = int_to_ptr.vmem [resolvable:$true] %s143
          %146 = dma.hbm_to_vmem [thread:$0]  %s141, 64, %s144, %s131
        $region20: #{tpu_custom_call.1} parent=15 // pred_fallthru
          _
        // Predicated region
        $region21: #{tpu_custom_call.1} parent=15 // pred_check
          %p147 = pneg %p76
        $region22: #{tpu_custom_call.1} parent=15 // pred_check_branch
          %149 = sbr.rel (%p147) target = $region24
        $region23: #{tpu_custom_call.1} parent=15 // pred_region
          %s150 = sand.u32 %s66, 1
          %s151 = scalar_lea.sflag [#allocation8], %s150
          %s152 = sand.u32 %s66, 1
          %s153 = scalar_lea.vmem [#allocation7], %s152
          %s155 = ssub.s32 16, 16
          %156 = vsyncadd %s151, %s155
          %s157 = smul.addr %s21, 2
          %s158 = sadd.s32 %s22, %s157
          %s159 = smul.addr %s158, 16
          %s160 = scalar_lea.hbm %s1, %s159
          %s162 = sshll.u32 %s153, 4
          %s163 = int_to_ptr.vmem [resolvable:$true] %s162
          %165 = dma.hbm_to_vmem [thread:$0]  %s160, 16, %s163, %s151
        $region24: #{tpu_custom_call.1} parent=15 // pred_fallthru
          _
      $region16: #{tpu_custom_call.1} parent=5 // pred_fallthru
        _
      %p166 = scmp.le.s32.totalorder 1, %s14
      %p167 = scmp.lt.s32.totalorder %s14, 5
      %p168 = pnand %p166, %p167
      %p169 = pneg %p168
      // Predicated region
      $region25: #{tpu_custom_call.1} parent=5 // pred_check
        _
      $region26: #{tpu_custom_call.1} parent=5 // pred_check_branch
        %171 = sbr.rel (%p168) target = $region28
      $region27: #{tpu_custom_call.1} parent=5 // pred_region
        %s172 = ssub.s32 %s14, 1
        %s173 = sand.u32 %s41, 1
        %s174 = scalar_lea.sflag [#allocation6], %s173
        %s175 = sand.u32 %s41, 1
        %s176 = smul.addr %s175, 4
        %s177 = scalar_lea.vmem [#allocation5], %s176
        // Predicated region
        $region29: #{tpu_custom_call.1} parent=27 // pred_check
          %p178 = pneg %p54
        $region30: #{tpu_custom_call.1} parent=27 // pred_check_branch
          %180 = sbr.rel (%p178) target = $region32
        $region31: #{tpu_custom_call.1} parent=27 // pred_region
          %181 = dma.done %s174, 64
        $region32: #{tpu_custom_call.1} parent=27 // pred_fallthru
          _
        %s182 = sand.u32 %s69, 1
        %s183 = scalar_lea.sflag [#allocation8], %s182
        %s184 = sand.u32 %s69, 1
        %s185 = scalar_lea.vmem [#allocation7], %s184
        // Predicated region
        $region33: #{tpu_custom_call.1} parent=27 // pred_check
          %p186 = pneg %p82
        $region34: #{tpu_custom_call.1} parent=27 // pred_check_branch
          %188 = sbr.rel (%p186) target = $region36
        $region35: #{tpu_custom_call.1} parent=27 // pred_region
          %189 = dma.done %s183, 16
        $region36: #{tpu_custom_call.1} parent=27 // pred_fallthru
          _
        %s190 = sand.u32 %s41, 1
        %s191 = scalar_lea.sflag [#allocation6], %s190
        %s192 = sand.u32 %s41, 1
        %s193 = smul.addr %s192, 4
        %s194 = scalar_lea.vmem [#allocation5], %s193
        %p195 = pneg %p54
        %p196 = pneg %p51
        %s197 = sand.u32 %s69, 1
        %s198 = scalar_lea.sflag [#allocation8], %s197
        %s199 = sand.u32 %s69, 1
        %s200 = scalar_lea.vmem [#allocation7], %s199
        %p201 = pneg %p82
        %p202 = pneg %p79
        %p203 = pneg %p108
        %p204 = pneg %p105
        %p205 = scmp.lt.s32.totalorder %s23, 1
        %s206 = scalar_select %p205, %s23, 1
        %s207 = smul.addr %s206, 4
        %s208 = scalar_lea.vmem %s2, %s207
        %p209 = scmp.lt.s32.totalorder %s23, 1
        %s210 = scalar_select %p209, %s23, 1
        %s211 = smul.addr %s210, 4
        %s212 = scalar_lea.vmem %s2, %s211
        %p213 = scmp.eq.s32.totalorder %s24, 0
        // Predicated region
        $region37: #{tpu_custom_call.1} parent=27 // pred_check
          %p214 = pneg %p213
        $region38: #{tpu_custom_call.1} parent=27 // pred_check_branch
          %216 = sbr.rel (%p214) target = $region40
        $region39: #{tpu_custom_call.1} parent=27 // pred_region
          %vm217 = vcmask 3072
          %218 = vst.msk [vmem:[#allocation2] sm:$0xf] %vm217, 0.0
          %219 = vst.msk [vmem:[#allocation3] sm:$0xf] %vm217, 0.0
          %220 = vst.msk [vmem:[#allocation4] sm:$0xf] %vm217, 0.0
        $region40: #{tpu_custom_call.1} parent=27 // pred_fallthru
          _
        %v221 = vlaneseq
        %v222 = vshrl.u32 %v221, 7
        %v223 = vld [vmem:[%s177] sm:$0xf]
        %v224 = vld [vmem:[%s185] sm:$0x1]
        %vm225 = vcmask 1043456
        %v226 = vsel %vm225, %v223, -inf
        %v227 = vrot.slane %v226, 4
        %v228 = vmax.f32 %v226, %v227
        %v229 = vrot.slane %v228, 2
        %v230 = vmax.f32 %v228, %v229
        %v231 = vrot.slane %v230, 1
        %v232 = vmax.f32 %v230, %v231
        %v233 = vsub.f32 %v223, %v232
        %v234 = vmul.f32 %v233, 1.442695
        %v235 = vpow.pop %v234
        %v236 = vsel %vm225, %v235, 0.0
        %v237 = vrot.slane %v236, 4
        %v238 = vadd.f32 %v236, %v237
        %v239 = vrot.slane %v238, 2
        %v240 = vadd.f32 %v238, %v239
        %v241 = vrot.slane %v240, 1
        %v242 = vadd.f32 %v240, %v241
        %v243 = vrcp.pop %v242
        %v244 = vmul.f32 %v242, %v243
        %v245 = vsub.f32 2.0, %v244
        %v246 = vmul.f32 %v243, %v245
        %v247 = vmul.f32 %v235, %v246
        %v248 = vlaneseq
        %v249 = vshrl.u32 %v248, 7
        %v250 = vsub.s32 0, %v249
        %v251 = vrot.slane %v224, %v250
        %vm252 = vcmp.eq.s32.totalorder %v251, %v222
        %v253 = vsel %vm252, %v247, 0.0
        %v254 = vsel %vm252, 1, 0
        %v255 = vcvt.s32.f32 %v254
        %v256 = vsel %vm225, %v253, 0.0
        %257 = vadd.xlane.f32.xlu0 %v256
        %v258 = vpop.xlane.xlu0 %257
        %v259 = vadd.f32 %v258, 0.0
        %v260 = vsel %vm225, %v247, 0.0
        %261 = vadd.xlane.f32.xlu0 %v260
        %v262 = vpop.xlane.xlu0 %261
        %v263 = vadd.f32 %v262, 0.0
        %v264 = vsel %vm225, %v255, 0.0
        %265 = vadd.xlane.f32.xlu0 %v264
        %v266 = vpop.xlane.xlu0 %265
        %v267 = vadd.f32 %v266, 0.0
        %v268 = vld [vmem:[#allocation2] sm:$0xf]
        %v269 = vadd.f32 %v268, %v259
        %vm270 = vcmask 3072
        %271 = vst.msk [vmem:[#allocation2] sm:$0xf] %vm270, %v269
        %v272 = vld [vmem:[#allocation3] sm:$0xf]
        %v273 = vadd.f32 %v272, %v263
        %274 = vst.msk [vmem:[#allocation3] sm:$0xf] %vm270, %v273
        %v275 = vld [vmem:[#allocation4] sm:$0xf]
        %v276 = vadd.f32 %v275, %v267
        %277 = vst.msk [vmem:[#allocation4] sm:$0xf] %vm270, %v276
        %p278 = scmp.eq.s32.totalorder %s24, 1
        // Predicated region
        $region41: #{tpu_custom_call.1} parent=27 // pred_check
          %p279 = pneg %p278
        $region42: #{tpu_custom_call.1} parent=27 // pred_check_branch
          %281 = sbr.rel (%p279) target = $region44
        $region43: #{tpu_custom_call.1} parent=27 // pred_region
          %v282 = vld [vmem:[#allocation2] sm:$0xf]
          %v283 = vld [vmem:[#allocation3] sm:$0xf]
          %v284 = vsub.f32 %v283, %v282
          %v285 = vld [vmem:[#allocation4] sm:$0xf]
          %v286 = vsub.f32 %v285, %v282
          %v287 = vadd.f32 %v282, 1e-06
          %v288 = vmul.f32 %v284, 0.7
          %v289 = vadd.f32 %v282, %v288
          %v290 = vmul.f32 %v286, 0.3
          %v291 = vadd.f32 %v289, %v290
          %v292 = vadd.f32 %v291, 1e-06
          %v293 = vrcp.pop %v292
          %v294 = vmul.f32 %v287, %v293
          %295 = vst.msk [vmem:[%s212] sm:$0xf] %vm270, %v294
        $region44: #{tpu_custom_call.1} parent=27 // pred_fallthru
          _
        %p296 = scmp.lt.s32.totalorder %s23, 1
        %s297 = scalar_select %p296, %s23, 1
        %s298 = smul.addr %s297, 4
        %s299 = scalar_lea.vmem %s2, %s298
        // Predicated region
        $region45: #{tpu_custom_call.1} parent=27 // pred_check
          %p300 = pneg %p105
        $region46: #{tpu_custom_call.1} parent=27 // pred_check_branch
          %302 = sbr.rel (%p300) target = $region48
        $region47: #{tpu_custom_call.1} parent=27 // pred_region
          _
        $region48: #{tpu_custom_call.1} parent=27 // pred_fallthru
          _
      $region28: #{tpu_custom_call.1} parent=5 // pred_fallthru
        _
      %p303 = scmp.le.s32.totalorder 2, %s14
      // Predicated region
      $region49: #{tpu_custom_call.1} parent=5 // pred_check
        %p304 = pneg %p303
      $region50: #{tpu_custom_call.1} parent=5 // pred_check_branch
        %306 = sbr.rel (%p304) target = $region52
      $region51: #{tpu_custom_call.1} parent=5 // pred_region
        %s307 = ssub.s32 %s14, 2
        // Predicated region
        $region53: #{tpu_custom_call.1} parent=51 // pred_check
          %p308 = pneg %p111
        $region54: #{tpu_custom_call.1} parent=51 // pred_check_branch
          %310 = sbr.rel (%p308) target = $region56
        $region55: #{tpu_custom_call.1} parent=51 // pred_region
          %p311 = scmp.lt.s32.totalorder %s25, 1
          %s312 = scalar_select %p311, %s25, 1
          %s313 = smul.addr %s312, 4
          %s314 = scalar_lea.vmem %s2, %s313
        $region56: #{tpu_custom_call.1} parent=51 // pred_fallthru
          _
      $region52: #{tpu_custom_call.1} parent=5 // pred_fallthru
        _
    $region6: #{tpu_custom_call.1} parent=1 // loop_footer
      %s18 = sadd.s32 1, %s14
    $region7: #{tpu_custom_call.1} parent=1 // loop_footer_branch
      %13 = sbr.rel target = $region3
    $region8: #{tpu_custom_call.1} parent=1 // loop_exit
      _
    %315 = vsyncpa [#allocation6], 1
    %s316 = scalar_lea.sflag [#allocation6], 1
    %317 = vsyncpa %s316, 1
    %318 = vsyncpa [#allocation8], 1
    %s319 = scalar_lea.sflag [#allocation8], 1
    %320 = vsyncpa %s319, 1

</llo_original>
